<compile_context>
chip_gen: v7x
topology: tpu7x:2x2x1
jax: 0.10.0
libtpu: 0.0.40
codegen_flags: <defaults>
</compile_context>

<pallas_src>
import functools

import jax
import jax.numpy as jnp
from jax import lax
from jax.experimental import pallas as pl
from jax.experimental.pallas import tpu as pltpu


def _pick_rows_per_block(ho, wo):
    """Output rows per MXU matmul block.

    Prefer M = rb*wo >= 256 (fills the MXU sublane pipe, amortizes push/drain)
    while keeping the per-block f32 result modest.  rb must divide ho so every
    block is full, and rb > 1 only when wo % 8 == 0 so the (rb, wo, K) ->
    (rb*wo, K) collapse is a layout no-op and stores stay sublane-aligned (v5e).
    """
    if wo % 8 != 0:
        return 1
    target = max(1, -(-256 // wo))
    divisors = [d for d in range(1, ho + 1) if ho % d == 0 and d * wo <= 1024]
    if not divisors:
        return 1
    geq = [d for d in divisors if d >= target]
    return min(geq) if geq else max(divisors)


def _block_kernel(x_ref, w_ref, o_ref, lhs_ref, *,
                  ho, wo, kh, nqx, stride, rb, eps, neg_slope):
    # x_ref  : (1, Hq, s, Wq, s*Cin)   bf16  reflect-padded image, H/W stride phases
    #                                        folded by pure reshapes in the wrapper
    # w_ref  : (kh*nqx*s*Cin, TC_N)    bf16  flattened conv weights (this Cout tile)
    # o_ref  : (1, Ho*Wo, TC_N)              output block (lane-dense)
    # lhs_ref: (rb*Wo, kh*nqx*s*Cin)   bf16  VMEM scratch for the K-merged LHS
    tc_n = o_ref.shape[-1]
    sc = x_ref.shape[-1]                      # s * Cin
    p = ho * wo
    m_blk = rb * wo
    nblk = ho // rb
    inv_p = 1.0 / p
    unroll = 2 if (nblk > 1 and nblk % 2 == 0) else 1

    def conv_body(blk, carry):
        s_acc, q_acc = carry
        oy0 = blk * rb
        # Assemble the K-merged LHS for this row block: one (M, kh*kw*Cin) matrix
        # instead of kh*nqx small dots -> a single MXU matmul, no f32 add chain.
        t = 0
        for ky in range(kh):                  # static, small (kh*nqx <= 16)
            hq0 = oy0 + ky // stride
            py = ky % stride
            for qx in range(nqx):
                part = x_ref[0, pl.ds(hq0, rb), py, pl.ds(qx, wo), :]
                lhs_ref[:, pl.ds(t * sc, sc)] = part.reshape(m_blk, sc)
                t += 1
        y = jnp.dot(lhs_ref[...], w_ref[...], preferred_element_type=jnp.float32)
        # Fused InstanceNorm statistics while y is still live -> the full (P, TC_N)
        # conv result is never re-read from VMEM for the stats.
        s_acc = s_acc + jnp.sum(y, axis=0, keepdims=True)
        q_acc = q_acc + jnp.sum(y * y, axis=0, keepdims=True)
        r0 = pl.multiple_of(blk * m_blk, m_blk)
        o_ref[0, pl.ds(r0, m_blk), :] = y.astype(o_ref.dtype)
        return s_acc, q_acc

    zeros = jnp.zeros((1, tc_n), jnp.float32)
    s_tot, q_tot = lax.fori_loop(0, nblk, conv_body, (zeros, zeros), unroll=unroll)

    # InstanceNorm2d (affine=False, biased variance over H*W), f32 throughout.
    mean = s_tot * inv_p
    var = jnp.maximum(q_tot * inv_p - mean * mean, 0.0)   # one-pass stats, clamp fp noise
    scale = lax.rsqrt(var + eps)

    def norm_body(blk, carry):
        r0 = pl.multiple_of(blk * m_blk, m_blk)
        y = o_ref[0, pl.ds(r0, m_blk), :].astype(jnp.float32)
        y = (y - mean) * scale
        y = jnp.where(y >= 0, y, neg_slope * y)            # LeakyReLU(0.2)
        o_ref[0, pl.ds(r0, m_blk), :] = y.astype(o_ref.dtype)
        return carry

    lax.fori_loop(0, nblk, norm_body, 0, unroll=unroll)


def block_forward(x_nchw, weight, bias=None, *, stride, eps=1e-5, neg_slope=0.2,
                  matmul_dtype=jnp.bfloat16):
    """Forward pass of `Block` on NCHW input, mirroring the PyTorch module."""
    n, cin, h, w_dim = x_nchw.shape
    cout, cin_w, kh, kw = weight.shape
    assert cin == cin_w
    s = int(stride)

    hp, wp = h + 2, w_dim + 2
    ho = (hp - kh) // s + 1
    wo = (wp - kw) // s + 1
    hq = -(-hp // s)                       # ceil(Hp / s)
    wq = -(-wp // s)
    nqx = (kw - 1) // s + 1                # width-phase groups per kernel row
    kk = kh * nqx * s * cin                # merged contraction size (>= kh*kw*cin)
    coutp = ((cout + 127) // 128) * 128    # lane-dense output channels
    # Cout tile = second (parallel) grid axis: pipelining depth / 2nd TC on v7x.
    tc_n = 256 if (coutp % 256 == 0 and coutp >= 512) else 128
    n_ct = coutp // tc_n
    p = ho * wo
    rb = _pick_rows_per_block(ho, wo)
    m_blk = rb * wo

    # Conv bias is intentionally not applied: InstanceNorm (affine=False) subtracts the
    # per-channel mean, which cancels a constant per-channel bias exactly.
    del bias

    # Cast to bf16 *before* the out-of-kernel transpose / reflect pad (both are
    # memory-bound XLA passes; this halves their HBM bytes).
    x = jnp.transpose(x_nchw.astype(matmul_dtype), (0, 2, 3, 1))
    x_pad = jnp.pad(x, ((0, 0), (1, 1), (1, 1), (0, 0)), mode="reflect")
    pad_h, pad_w = hq * s - hp, wq * s - wp
    if pad_h or pad_w:                     # stride-alignment padding (never read)
        x_pad = jnp.pad(x_pad, ((0, 0), (0, pad_h), (0, pad_w), (0, 0)))
    # Pure row-major reshape: fold H and W stride-phases into their own dims.
    #   x_r[n, hq, ph, wq, px*Cin + c] == x_pad[n, s*hq + ph, s*wq + px, c]
    x_r = x_pad.reshape(n, hq, s, wq, s * cin)

    # Flatten conv weights to (kh*nqx*s*Cin, Coutp) in the kernel's LHS-assembly order:
    #   K index = ((ky*nqx + qx)*s + px)*Cin + c   with   kx = s*qx + px.
    wt = jnp.transpose(weight, (2, 3, 1, 0)).astype(jnp.float32)   # (kh, kw, cin, cout)
    if nqx * s != kw:                      # phantom (zero) taps only if s doesn't divide kw
        wt = jnp.pad(wt, ((0, 0), (0, nqx * s - kw), (0, 0), (0, 0)))
    w_flat = jnp.pad(wt.reshape(kk, cout),
                     ((0, 0), (0, coutp - cout))).astype(matmul_dtype)

    kernel = functools.partial(_block_kernel, ho=ho, wo=wo, kh=kh, nqx=nqx,
                               stride=s, rb=rb, eps=eps, neg_slope=neg_slope)

    out_dtype = x_nchw.dtype
    out_isz = jnp.dtype(out_dtype).itemsize
    flops = 2 * n * p * kh * kw * cin * cout
    bytes_accessed = (x_r.size * x_r.dtype.itemsize
                      + w_flat.size * w_flat.dtype.itemsize
                      + n * p * coutp * out_isz)

    # VMEM budget: double-buffered x / w / out blocks + LHS scratch + matmul temps.
    blk_bytes = (2 * hq * s * wq * s * cin * 2     # x block (bf16, double-buffered)
                 + 2 * kk * tc_n * 2               # w block
                 + 2 * p * tc_n * out_isz          # out block
                 + m_blk * kk * 2                  # LHS scratch
                 + 2 * m_blk * tc_n * 4)           # dot result / norm temporaries
    vmem_limit = int(min(max(2 * blk_bytes, 32 * 1024 * 1024), 64 * 1024 * 1024))

    out = pl.pallas_call(
        kernel,
        out_shape=jax.ShapeDtypeStruct((n, p, coutp), out_dtype),
        grid_spec=pltpu.PrefetchScalarGridSpec(
            num_scalar_prefetch=0,
            grid=(n, n_ct),                # j (Cout tile) is the inner axis: the x block
                                           # index is unchanged across j, so its DMA is
                                           # skipped between consecutive steps.
            in_specs=[
                pl.BlockSpec((1, hq, s, wq, s * cin), lambda i, j: (i, 0, 0, 0, 0)),
                pl.BlockSpec((kk, tc_n), lambda i, j: (0, j)),
            ],
            out_specs=pl.BlockSpec((1, p, tc_n), lambda i, j: (i, 0, j)),
            scratch_shapes=[pltpu.VMEM((m_blk, kk), matmul_dtype)],
        ),
        compiler_params=pltpu.CompilerParams(
            dimension_semantics=("parallel", "parallel"),
            vmem_limit_bytes=vmem_limit),
        cost_estimate=pl.CostEstimate(
            flops=flops, transcendentals=n * coutp, bytes_accessed=bytes_accessed),
    )(x_r, w_flat)

    # (N, P, Coutp) -> drop channel padding -> NHWC -> NCHW.
    out = out[:, :, :cout].reshape(n, ho, wo, cout)
    return jnp.transpose(out, (0, 3, 1, 2))


def _reference_forward(x_nchw, weight, bias, *, stride, eps=1e-5, neg_slope=0.2):
    """Pure-JAX f32 reference (im2col form) used only for a tolerance check."""
    n, cin, h, w_dim = x_nchw.shape
    cout, _, kh, kw = weight.shape
    x = jnp.transpose(x_nchw, (0, 2, 3, 1)).astype(jnp.float32)
    x_pad = jnp.pad(x, ((0, 0), (1, 1), (1, 1), (0, 0)), mode="reflect")
    ho = (h + 2 - kh) // stride + 1
    wo = (w_dim + 2 - kw) // stride + 1
    cols = []
    for ky in range(kh):
        for kx in range(kw):
            cols.append(x_pad[:, ky:ky + stride * (ho - 1) + 1:stride,
                                 kx:kx + stride * (wo - 1) + 1:stride, :])
    patches = jnp.concatenate(cols, axis=-1).reshape(n, ho * wo, kh * kw * cin)
    w_flat = jnp.transpose(weight, (2, 3, 1, 0)).reshape(kh * kw * cin, cout)
    y = patches @ w_flat + bias[None, None, :]
    mean = jnp.mean(y, axis=1, keepdims=True)
    var = jnp.mean((y - mean) ** 2, axis=1, keepdims=True)
    y = (y - mean) * lax.rsqrt(var + eps)
    y = jnp.where(y >= 0, y, neg_slope * y)
    return jnp.transpose(y.reshape(n, ho, wo, cout), (0, 3, 1, 2))


if __name__ == "__main__":
    # Module config: Block(in_channels=4, out_channels=8, stride=2)
    in_channels, out_channels, stride = 4, 8, 2
    batch, spatial = 2, 16

    key = jax.random.PRNGKey(0)
    k_x, k_w, k_b = jax.random.split(key, 3)

    x = jax.random.normal(k_x, (batch, in_channels, spatial, spatial), jnp.float32)
    fan_in = in_channels * 4 * 4
    weight = jax.random.normal(k_w, (out_channels, in_channels, 4, 4),
                               jnp.float32) / jnp.sqrt(fan_in)
    bias = jax.random.normal(k_b, (out_channels,), jnp.float32) * 0.01

    fwd = jax.jit(functools.partial(block_forward, stride=stride))
    y = fwd(x, weight, bias)
    jax.block_until_ready(y)

    expected_hw = (spatial + 2 - 4) // stride + 1
    assert y.shape == (batch, out_channels, expected_hw, expected_hw), y.shape
    assert bool(jnp.all(jnp.isfinite(y)))

    # Loose tolerance: kernel uses bf16 matmul operands with f32 accumulation.
    y_ref = _reference_forward(x, weight, bias, stride=stride)
    assert bool(jnp.allclose(y, y_ref, rtol=5e-2, atol=1e-1)), \
        float(jnp.max(jnp.abs(y - y_ref)))

    print("KERNEL_OK")
</pallas_src>

<mosaic_0001>
module attributes {stable_mosaic.version = 11 : i64} {
  func.func @_block_kernel(%arg0: i32, %arg1: i32, %arg2: memref<1x9x2x9x8xbf16, #tpu.memory_space<vmem>>, %arg3: memref<64x128xbf16, #tpu.memory_space<vmem>>, %arg4: memref<1x64x128xf32, #tpu.memory_space<vmem>>, %arg5: memref<64x64xbf16, #tpu.memory_space<vmem>>) attributes {dimension_semantics = [#tpu.dimension_semantics<parallel>, #tpu.dimension_semantics<parallel>], iteration_bounds = array<i64: 2, 1>, scalar_prefetch = 0 : i64, scratch_operands = 1 : i64, tpu.core_type = #tpu.core_type<tc>, window_params = [{transform_indices = @transform_0, window_bounds = array<i64: 1, 9, 2, 9, 8>}, {transform_indices = @transform_1, window_bounds = array<i64: 64, 128>}, {transform_indices = @transform_2, window_bounds = array<i64: 1, 64, 128>}]} {
    %cst = arith.constant 0.000000e+00 : f32
    %0 = vector.broadcast %cst : f32 to vector<1x128xf32>
    %c0_i32 = arith.constant 0 : i32
    %c8_i32 = arith.constant 8 : i32
    %1 = arith.muli %c0_i32, %c8_i32 : i32
    %c0_i32_0 = arith.constant 0 : i32
    %2 = arith.addi %1, %c0_i32_0 : i32
    %c0 = arith.constant 0 : index
    %3 = arith.index_cast %2 : i32 to index
    %c0_1 = arith.constant 0 : index
    %c0_2 = arith.constant 0 : index
    %c0_3 = arith.constant 0 : index
    %4 = vector.load %arg2[%c0, %3, %c0_1, %c0_2, %c0_3] : memref<1x9x2x9x8xbf16, #tpu.memory_space<vmem>>, vector<1x8x1x8x8xbf16>
    %5 = vector.shape_cast %4 : vector<1x8x1x8x8xbf16> to vector<8x8x8xbf16>
    %6 = vector.shape_cast %5 : vector<8x8x8xbf16> to vector<64x8xbf16>
    %c0_4 = arith.constant 0 : index
    %c0_5 = arith.constant 0 : index
    %7 = vector.load %arg5[%c0_4, %c0_5] : memref<64x64xbf16, #tpu.memory_space<vmem>>, vector<64x8xbf16>
    tpu.vector_store %arg5[%c0_4, %c0_5], %6 {strides = array<i32>} : memref<64x64xbf16, #tpu.memory_space<vmem>>, vector<64x8xbf16>,
    %c0_6 = arith.constant 0 : index
    %8 = arith.index_cast %2 : i32 to index
    %c0_7 = arith.constant 0 : index
    %c1 = arith.constant 1 : index
    %c0_8 = arith.constant 0 : index
    %9 = vector.load %arg2[%c0_6, %8, %c0_7, %c1, %c0_8] : memref<1x9x2x9x8xbf16, #tpu.memory_space<vmem>>, vector<1x8x1x8x8xbf16>
    %10 = vector.shape_cast %9 : vector<1x8x1x8x8xbf16> to vector<8x8x8xbf16>
    %11 = vector.shape_cast %10 : vector<8x8x8xbf16> to vector<64x8xbf16>
    %c0_9 = arith.constant 0 : index
    %c8 = arith.constant 8 : index
    %12 = vector.load %arg5[%c0_9, %c8] : memref<64x64xbf16, #tpu.memory_space<vmem>>, vector<64x8xbf16>
    tpu.vector_store %arg5[%c0_9, %c8], %11 {strides = array<i32>} : memref<64x64xbf16, #tpu.memory_space<vmem>>, vector<64x8xbf16>,
    %c0_i32_10 = arith.constant 0 : i32
    %13 = arith.addi %1, %c0_i32_10 : i32
    %c0_11 = arith.constant 0 : index
    %14 = arith.index_cast %13 : i32 to index
    %c1_12 = arith.constant 1 : index
    %c0_13 = arith.constant 0 : index
    %c0_14 = arith.constant 0 : index
    %15 = vector.load %arg2[%c0_11, %14, %c1_12, %c0_13, %c0_14] : memref<1x9x2x9x8xbf16, #tpu.memory_space<vmem>>, vector<1x8x1x8x8xbf16>
    %16 = vector.shape_cast %15 : vector<1x8x1x8x8xbf16> to vector<8x8x8xbf16>
    %17 = vector.shape_cast %16 : vector<8x8x8xbf16> to vector<64x8xbf16>
    %c0_15 = arith.constant 0 : index
    %c16 = arith.constant 16 : index
    %18 = vector.load %arg5[%c0_15, %c16] : memref<64x64xbf16, #tpu.memory_space<vmem>>, vector<64x8xbf16>
    tpu.vector_store %arg5[%c0_15, %c16], %17 {strides = array<i32>} : memref<64x64xbf16, #tpu.memory_space<vmem>>, vector<64x8xbf16>,
    %c0_16 = arith.constant 0 : index
    %19 = arith.index_cast %13 : i32 to index
    %c1_17 = arith.constant 1 : index
    %c1_18 = arith.constant 1 : index
    %c0_19 = arith.constant 0 : index
    %20 = vector.load %arg2[%c0_16, %19, %c1_17, %c1_18, %c0_19] : memref<1x9x2x9x8xbf16, #tpu.memory_space<vmem>>, vector<1x8x1x8x8xbf16>
    %21 = vector.shape_cast %20 : vector<1x8x1x8x8xbf16> to vector<8x8x8xbf16>
    %22 = vector.shape_cast %21 : vector<8x8x8xbf16> to vector<64x8xbf16>
    %c0_20 = arith.constant 0 : index
    %c24 = arith.constant 24 : index
    %23 = vector.load %arg5[%c0_20, %c24] : memref<64x64xbf16, #tpu.memory_space<vmem>>, vector<64x8xbf16>
    tpu.vector_store %arg5[%c0_20, %c24], %22 {strides = array<i32>} : memref<64x64xbf16, #tpu.memory_space<vmem>>, vector<64x8xbf16>,
    %c1_i32 = arith.constant 1 : i32
    %24 = arith.addi %1, %c1_i32 : i32
    %c0_21 = arith.constant 0 : index
    %25 = arith.index_cast %24 : i32 to index
    %c0_22 = arith.constant 0 : index
    %c0_23 = arith.constant 0 : index
    %c0_24 = arith.constant 0 : index
    %26 = vector.load %arg2[%c0_21, %25, %c0_22, %c0_23, %c0_24] : memref<1x9x2x9x8xbf16, #tpu.memory_space<vmem>>, vector<1x8x1x8x8xbf16>
    %27 = vector.shape_cast %26 : vector<1x8x1x8x8xbf16> to vector<8x8x8xbf16>
    %28 = vector.shape_cast %27 : vector<8x8x8xbf16> to vector<64x8xbf16>
    %c0_25 = arith.constant 0 : index
    %c32 = arith.constant 32 : index
    %29 = vector.load %arg5[%c0_25, %c32] : memref<64x64xbf16, #tpu.memory_space<vmem>>, vector<64x8xbf16>
    tpu.vector_store %arg5[%c0_25, %c32], %28 {strides = array<i32>} : memref<64x64xbf16, #tpu.memory_space<vmem>>, vector<64x8xbf16>,
    %c0_26 = arith.constant 0 : index
    %30 = arith.index_cast %24 : i32 to index
    %c0_27 = arith.constant 0 : index
    %c1_28 = arith.constant 1 : index
    %c0_29 = arith.constant 0 : index
    %31 = vector.load %arg2[%c0_26, %30, %c0_27, %c1_28, %c0_29] : memref<1x9x2x9x8xbf16, #tpu.memory_space<vmem>>, vector<1x8x1x8x8xbf16>
    %32 = vector.shape_cast %31 : vector<1x8x1x8x8xbf16> to vector<8x8x8xbf16>
    %33 = vector.shape_cast %32 : vector<8x8x8xbf16> to vector<64x8xbf16>
    %c0_30 = arith.constant 0 : index
    %c40 = arith.constant 40 : index
    %34 = vector.load %arg5[%c0_30, %c40] : memref<64x64xbf16, #tpu.memory_space<vmem>>, vector<64x8xbf16>
    tpu.vector_store %arg5[%c0_30, %c40], %33 {strides = array<i32>} : memref<64x64xbf16, #tpu.memory_space<vmem>>, vector<64x8xbf16>,
    %c1_i32_31 = arith.constant 1 : i32
    %35 = arith.addi %1, %c1_i32_31 : i32
    %c0_32 = arith.constant 0 : index
    %36 = arith.index_cast %35 : i32 to index
    %c1_33 = arith.constant 1 : index
    %c0_34 = arith.constant 0 : index
    %c0_35 = arith.constant 0 : index
    %37 = vector.load %arg2[%c0_32, %36, %c1_33, %c0_34, %c0_35] : memref<1x9x2x9x8xbf16, #tpu.memory_space<vmem>>, vector<1x8x1x8x8xbf16>
    %38 = vector.shape_cast %37 : vector<1x8x1x8x8xbf16> to vector<8x8x8xbf16>
    %39 = vector.shape_cast %38 : vector<8x8x8xbf16> to vector<64x8xbf16>
    %c0_36 = arith.constant 0 : index
    %c48 = arith.constant 48 : index
    %40 = vector.load %arg5[%c0_36, %c48] : memref<64x64xbf16, #tpu.memory_space<vmem>>, vector<64x8xbf16>
    tpu.vector_store %arg5[%c0_36, %c48], %39 {strides = array<i32>} : memref<64x64xbf16, #tpu.memory_space<vmem>>, vector<64x8xbf16>,
    %c0_37 = arith.constant 0 : index
    %41 = arith.index_cast %35 : i32 to index
    %c1_38 = arith.constant 1 : index
    %c1_39 = arith.constant 1 : index
    %c0_40 = arith.constant 0 : index
    %42 = vector.load %arg2[%c0_37, %41, %c1_38, %c1_39, %c0_40] : memref<1x9x2x9x8xbf16, #tpu.memory_space<vmem>>, vector<1x8x1x8x8xbf16>
    %43 = vector.shape_cast %42 : vector<1x8x1x8x8xbf16> to vector<8x8x8xbf16>
    %44 = vector.shape_cast %43 : vector<8x8x8xbf16> to vector<64x8xbf16>
    %c0_41 = arith.constant 0 : index
    %c56 = arith.constant 56 : index
    %45 = vector.load %arg5[%c0_41, %c56] : memref<64x64xbf16, #tpu.memory_space<vmem>>, vector<64x8xbf16>
    tpu.vector_store %arg5[%c0_41, %c56], %44 {strides = array<i32>} : memref<64x64xbf16, #tpu.memory_space<vmem>>, vector<64x8xbf16>,
    %c0_42 = arith.constant 0 : index
    %c0_43 = arith.constant 0 : index
    %46 = vector.load %arg5[%c0_42, %c0_43] : memref<64x64xbf16, #tpu.memory_space<vmem>>, vector<64x64xbf16>
    %c0_44 = arith.constant 0 : index
    %c0_45 = arith.constant 0 : index
    %47 = vector.load %arg3[%c0_44, %c0_45] : memref<64x128xbf16, #tpu.memory_space<vmem>>, vector<64x128xbf16>
    %cst_46 = arith.constant dense<0.000000e+00> : vector<64x128xf32>
    %48 = tpu.matmul %46, %47, %cst_46 {dimension_numbers = #tpu.dot_dimension_numbers<[1], [0], [0], [1], [0, 0, 1, 1], [], []>} : vector<64x64xbf16>, vector<64x128xbf16>, vector<64x128xf32> -> vector<64x128xf32>
    %cst_47 = arith.constant dense<0.000000e+00> : vector<128xf32>
    %49 = vector.multi_reduction <add>, %48, %cst_47 [0] : vector<64x128xf32> to vector<128xf32>
    %50 = vector.shape_cast %49 : vector<128xf32> to vector<1x128xf32>
    %51 = arith.addf %0, %50 : vector<1x128xf32>
    %52 = arith.mulf %48, %48 : vector<64x128xf32>
    %cst_48 = arith.constant dense<0.000000e+00> : vector<128xf32>
    %53 = vector.multi_reduction <add>, %52, %cst_48 [0] : vector<64x128xf32> to vector<128xf32>
    %54 = vector.shape_cast %53 : vector<128xf32> to vector<1x128xf32>
    %55 = arith.addf %0, %54 : vector<1x128xf32>
    %c64_i32 = arith.constant 64 : i32
    %56 = arith.muli %c0_i32, %c64_i32 : i32
    %57 = tpu.assume_multiple %56, 64 : i32
    %c0_49 = arith.constant 0 : index
    %58 = arith.index_cast %57 : i32 to index
    %c0_50 = arith.constant 0 : index
    %59 = vector.load %arg4[%c0_49, %58, %c0_50] : memref<1x64x128xf32, #tpu.memory_space<vmem>>, vector<1x64x128xf32>
    %60 = vector.shape_cast %59 : vector<1x64x128xf32> to vector<64x128xf32>
    %61 = vector.shape_cast %48 : vector<64x128xf32> to vector<1x64x128xf32>
    tpu.vector_store %arg4[%c0_49, %58, %c0_50], %61 {strides = array<i32>} : memref<1x64x128xf32, #tpu.memory_space<vmem>>, vector<1x64x128xf32>,
    %c1_i32_51 = arith.constant 1 : i32
    %cst_52 = arith.constant 1.562500e-02 : f32
    %62 = vector.broadcast %cst_52 : f32 to vector<1x128xf32>
    %63 = arith.mulf %51, %62 : vector<1x128xf32>
    %cst_53 = arith.constant 1.562500e-02 : f32
    %64 = vector.broadcast %cst_53 : f32 to vector<1x128xf32>
    %65 = arith.mulf %55, %64 : vector<1x128xf32>
    %66 = arith.mulf %63, %63 : vector<1x128xf32>
    %67 = arith.subf %65, %66 : vector<1x128xf32>
    %cst_54 = arith.constant 0.000000e+00 : f32
    %68 = vector.broadcast %cst_54 : f32 to vector<1x128xf32>
    %69 = arith.maximumf %67, %68 : vector<1x128xf32>
    %cst_55 = arith.constant 9.99999974E-6 : f32
    %70 = vector.broadcast %cst_55 : f32 to vector<1x128xf32>
    %71 = arith.addf %69, %70 : vector<1x128xf32>
    %72 = math.rsqrt %71 : vector<1x128xf32>
    %c0_i32_56 = arith.constant 0 : i32
    %c64_i32_57 = arith.constant 64 : i32
    %73 = arith.muli %c0_i32_56, %c64_i32_57 : i32
    %74 = tpu.assume_multiple %73, 64 : i32
    %c0_58 = arith.constant 0 : index
    %75 = arith.index_cast %74 : i32 to index
    %c0_59 = arith.constant 0 : index
    %76 = vector.load %arg4[%c0_58, %75, %c0_59] : memref<1x64x128xf32, #tpu.memory_space<vmem>>, vector<1x64x128xf32>
    %77 = vector.shape_cast %76 : vector<1x64x128xf32> to vector<64x128xf32>
    %78 = vector.broadcast %63 : vector<1x128xf32> to vector<64x128xf32>
    %79 = arith.subf %77, %78 : vector<64x128xf32>
    %80 = vector.broadcast %72 : vector<1x128xf32> to vector<64x128xf32>
    %81 = arith.mulf %79, %80 : vector<64x128xf32>
    %cst_60 = arith.constant 0.000000e+00 : f32
    %82 = vector.broadcast %cst_60 : f32 to vector<64x128xf32>
    %83 = arith.cmpf oge, %81, %82 : vector<64x128xf32>
    %cst_61 = arith.constant 2.000000e-01 : f32
    %84 = vector.broadcast %cst_61 : f32 to vector<64x128xf32>
    %85 = arith.mulf %84, %81 : vector<64x128xf32>
    %86 = arith.select %83, %81, %85 : vector<64x128xi1>, vector<64x128xf32>
    %c0_62 = arith.constant 0 : index
    %87 = arith.index_cast %74 : i32 to index
    %c0_63 = arith.constant 0 : index
    %88 = vector.load %arg4[%c0_62, %87, %c0_63] : memref<1x64x128xf32, #tpu.memory_space<vmem>>, vector<1x64x128xf32>
    %89 = vector.shape_cast %88 : vector<1x64x128xf32> to vector<64x128xf32>
    %90 = vector.shape_cast %86 : vector<64x128xf32> to vector<1x64x128xf32>
    tpu.vector_store %arg4[%c0_62, %87, %c0_63], %90 {strides = array<i32>} : memref<1x64x128xf32, #tpu.memory_space<vmem>>, vector<1x64x128xf32>,
    %c1_i32_64 = arith.constant 1 : i32
    return
  }
  func.func @transform_0(%arg0: i32, %arg1: i32) -> (i32, i32, i32, i32, i32) {
    %c0_i32 = arith.constant 0 : i32
    %c0_i32_0 = arith.constant 0 : i32
    %c0_i32_1 = arith.constant 0 : i32
    %c0_i32_2 = arith.constant 0 : i32
    %c0_i32_3 = arith.constant 0 : i32
    return %arg0, %c0_i32, %c0_i32_0, %c0_i32_1, %c0_i32_2 : i32, i32, i32, i32, i32
  }
  func.func @transform_1(%arg0: i32, %arg1: i32) -> (i32, i32) {
    %c0_i32 = arith.constant 0 : i32
    %c0_i32_0 = arith.constant 0 : i32
    return %c0_i32, %arg1 : i32, i32
  }
  func.func @transform_2(%arg0: i32, %arg1: i32) -> (i32, i32, i32) {
    %c0_i32 = arith.constant 0 : i32
    %c0_i32_0 = arith.constant 0 : i32
    return %arg0, %c0_i32, %arg1 : i32, i32, i32
  }
}

</mosaic_0001>

<llo_original>
// kernel: block_forward.1
$region0: #{block_forward.1}
  #allocation0 [shape = 'u32[]', space=smem, size = 0x4, offset = 0x4, fixed_abs, tag = 'smem constant byte address 0x4 - core index']
  #allocation1 [shape = 'u32[144,128]{1,0:T(1,128)}', space=vmem, size = 0x12000, scoped, tag = 'internal scratch']
  #allocation2 [shape = 'bf16[64,64]{1,0:T(16,128)(2,1)}', space=vmem, size = 0x4000, scoped, tag = 'scratch operand']
  %s0 = inlined_call_operand.vmem [shape: bf16[2,9,2,9,8], index: 0, kind: input, shape index: {}]
  %s1 = inlined_call_operand.vmem [shape: bf16[64,128], index: 1, kind: input, shape index: {}]
  %s2 = inlined_call_operand.vmem [shape: f32[2,64,128], index: 2, kind: output, shape index: {}]
  %s3 = sld [smem:[#allocation0]]
  $region41: #{block_forward.1} parent=0
    _
  %s5 = ssub.s32 1, %s3
  %s6 = scalar_select 0, %s5, %s3
  loop: start=0, step=1, limit=4
  $region2: #{block_forward.1} parent=0 // loop_pre_header
    _
  $region3: #{block_forward.1} parent=0 // loop_header
    %s8 = sphi 0, %s12
    %p9 = scmp.ge.s32.totalorder %s8, 4
    %s15 = sphi 0, %s27
    %s16 = sphi 0, %s23
    %s17 = sphi 0, %s15
    %s18 = sphi 0, %s16
    %s19 = sphi 0, %s17
    %s20 = sphi 0, %s18
    %s30 = sphi 0, %s32
    %s33 = sphi 0, %s30
    %s34 = sphi 0, %s33
    %s50 = sphi 0, %s34
    %s56 = sphi 0, %s58
    %s59 = sphi 0, %s56
    %s60 = sphi 0, %s59
    %s76 = sphi 0, %s60
    %s84 = sphi 0, %s86
    %s87 = sphi 0, %s84
    %s88 = sphi 0, %s87
    %s104 = sphi 0, %s88
  $region4: #{block_forward.1} parent=0 // loop_header_branch
    %11 = sbr.rel (%p9) target = $region8
  $region5: #{block_forward.1} parent=0 // loop_body
    %s13 = ssub.s32 %s8, 1
    %s14 = ssub.s32 %s8, 2
    %s21 = sadd.s32 1, %s16
    %p22 = scmp.ge.s32.totalorder %s21, 1
    %s23 = scalar_select %p22, 0, %s21
    %s24 = sadd.s32 1, %s15
    %s25 = scalar_select %p22, %s24, %s15
    %p26 = scmp.ge.s32.totalorder %s25, 2
    %s27 = scalar_select %p26, 0, %s25
    %s28 = ssub.s32 %s15, %s27
    %p29 = scmp.eq.s32.totalorder %s28, 0
    %s31 = sadd.s32 %s30, 1
    %s32 = scalar_select %p29, %s30, %s31
    %p35 = pneg %p29
    %p36 = scmp.eq.s32.totalorder %s8, 1
    %p37 = por %p35, %p36
    %p38 = scmp.ne.s32.totalorder %s30, %s33
    %p39 = scmp.eq.s32.totalorder %s8, 0
    %p40 = por %p38, %p39
    %p41 = scmp.ne.s32.totalorder %s30, %s33
    %p42 = scmp.eq.s32.totalorder %s13, 1
    %p43 = por %p41, %p42
    %p44 = scmp.ne.s32.totalorder %s33, %s34
    %p45 = scmp.eq.s32.totalorder %s13, 0
    %p46 = por %p44, %p45
    %p47 = scmp.ne.s32.totalorder %s33, %s34
    %p48 = scmp.eq.s32.totalorder %s14, 1
    %p49 = por %p47, %p48
    %p51 = scmp.ne.s32.totalorder %s34, %s50
    %p52 = scmp.eq.s32.totalorder %s14, 0
    %p53 = por %p51, %p52
    %s54 = ssub.s32 %s16, %s23
    %p55 = scmp.eq.s32.totalorder %s54, 0
    %s57 = sadd.s32 %s56, 1
    %s58 = scalar_select %p55, %s56, %s57
    %p61 = pneg %p55
    %p62 = scmp.eq.s32.totalorder %s8, 1
    %p63 = por %p61, %p62
    %p64 = scmp.ne.s32.totalorder %s56, %s59
    %p65 = scmp.eq.s32.totalorder %s8, 0
    %p66 = por %p64, %p65
    %p67 = scmp.ne.s32.totalorder %s56, %s59
    %p68 = scmp.eq.s32.totalorder %s13, 1
    %p69 = por %p67, %p68
    %p70 = scmp.ne.s32.totalorder %s59, %s60
    %p71 = scmp.eq.s32.totalorder %s13, 0
    %p72 = por %p70, %p71
    %p73 = scmp.ne.s32.totalorder %s59, %s60
    %p74 = scmp.eq.s32.totalorder %s14, 1
    %p75 = por %p73, %p74
    %p77 = scmp.ne.s32.totalorder %s60, %s76
    %p78 = scmp.eq.s32.totalorder %s14, 0
    %p79 = por %p77, %p78
    %s80 = ssub.s32 %s15, %s27
    %s81 = ssub.s32 %s16, %s23
    %s82 = sor.u32 %s80, %s81
    %p83 = scmp.eq.s32.totalorder %s82, 0
    %s85 = sadd.s32 %s84, 1
    %s86 = scalar_select %p83, %s84, %s85
    %p89 = pneg %p83
    %p90 = scmp.eq.s32.totalorder %s8, 1
    %p91 = por %p89, %p90
    %p92 = scmp.ne.s32.totalorder %s84, %s87
    %p93 = scmp.eq.s32.totalorder %s8, 0
    %p94 = por %p92, %p93
    %p95 = scmp.ne.s32.totalorder %s84, %s87
    %p96 = scmp.eq.s32.totalorder %s13, 1
    %p97 = por %p95, %p96
    %p98 = scmp.ne.s32.totalorder %s87, %s88
    %p99 = scmp.eq.s32.totalorder %s13, 0
    %p100 = por %p98, %p99
    %p101 = scmp.ne.s32.totalorder %s87, %s88
    %p102 = scmp.eq.s32.totalorder %s14, 1
    %p103 = por %p101, %p102
    %p105 = scmp.ne.s32.totalorder %s88, %s104
    %p106 = scmp.eq.s32.totalorder %s14, 0
    %p107 = por %p105, %p106
    %p108 = scmp.le.s32.totalorder 1, %s8
    %p109 = scmp.lt.s32.totalorder %s8, 3
    %p110 = pnand %p108, %p109
    %p111 = pneg %p110
    // Predicated region
    $region9: #{block_forward.1} parent=5 // pred_check
      _
    $region10: #{block_forward.1} parent=5 // pred_check_branch
      %113 = sbr.rel (%p110) target = $region12
    $region11: #{block_forward.1} parent=5 // pred_region
      %s114 = ssub.s32 %s8, 1
      // Predicated region
      $region13: #{block_forward.1} parent=11 // pred_check
        %p115 = pneg %p72
      $region14: #{block_forward.1} parent=11 // pred_check_branch
        %117 = sbr.rel (%p115) target = $region16
      $region15: #{block_forward.1} parent=11 // pred_region
        %p118 = scmp.lt.s32.totalorder %s18, 0
        %s119 = scalar_select %p118, %s18, 0
        %s120 = smul.addr %s119, 4
        %s121 = scalar_lea.vmem %s1, %s120
      $region16: #{block_forward.1} parent=11 // pred_fallthru
        _
    $region12: #{block_forward.1} parent=5 // pred_fallthru
      _
    %p122 = scmp.lt.s32.totalorder %s8, 2
    // Predicated region
    $region17: #{block_forward.1} parent=5 // pred_check
      %p123 = pneg %p122
    $region18: #{block_forward.1} parent=5 // pred_check_branch
      %125 = sbr.rel (%p123) target = $region20
    $region19: #{block_forward.1} parent=5 // pred_region
      // Predicated region
      $region21: #{block_forward.1} parent=19 // pred_check
        %p126 = pneg %p40
      $region22: #{block_forward.1} parent=19 // pred_check_branch
        %128 = sbr.rel (%p126) target = $region24
      $region23: #{block_forward.1} parent=19 // pred_region
        %p129 = scmp.lt.s32.totalorder %s15, 1
        %s130 = scalar_select %p129, %s15, 1
        %s131 = smul.addr %s130, 36
        %s132 = smul.addr %s131, 4
        %s133 = scalar_lea.vmem %s0, %s132
      $region24: #{block_forward.1} parent=19 // pred_fallthru
        _
    $region20: #{block_forward.1} parent=5 // pred_fallthru
      _
    %p134 = scmp.le.s32.totalorder 1, %s8
    %p135 = scmp.lt.s32.totalorder %s8, 3
    %p136 = pnand %p134, %p135
    %p137 = pneg %p136
    // Predicated region
    $region25: #{block_forward.1} parent=5 // pred_check
      _
    $region26: #{block_forward.1} parent=5 // pred_check_branch
      %139 = sbr.rel (%p136) target = $region28
    $region27: #{block_forward.1} parent=5 // pred_region
      %s140 = ssub.s32 %s8, 1
      %p141 = scmp.lt.s32.totalorder %s17, 1
      %s142 = scalar_select %p141, %s17, 1
      %s143 = smul.addr %s142, 36
      %s144 = smul.addr %s143, 4
      %s145 = scalar_lea.vmem %s0, %s144
      %p146 = pneg %p46
      %p147 = pneg %p43
      %p148 = scmp.lt.s32.totalorder %s18, 0
      %s149 = scalar_select %p148, %s18, 0
      %s150 = smul.addr %s149, 4
      %s151 = scalar_lea.vmem %s1, %s150
      %p152 = pneg %p72
      %p153 = pneg %p69
      %p154 = pneg %p100
      %p155 = pneg %p97
      %p156 = scmp.lt.s32.totalorder %s17, 1
      %s157 = scalar_select %p156, %s17, 1
      %p158 = scmp.lt.s32.totalorder %s18, 0
      %s159 = scalar_select %p158, %s18, 0
      %s160 = smul.addr %s157, 8
      %s161 = sadd.s32 %s159, %s160
      %s162 = smul.addr %s161, 8
      %s163 = scalar_lea.vmem %s2, %s162
      %p164 = scmp.lt.s32.totalorder %s17, 1
      %s165 = scalar_select %p164, %s17, 1
      %s166 = smul.addr %s165, 36
      %s167 = smul.addr %s166, 4
      %s168 = scalar_lea.vmem %s0, %s167
      %p169 = scmp.lt.s32.totalorder %s18, 0
      %s170 = scalar_select %p169, %s18, 0
      %s171 = smul.addr %s170, 4
      %s172 = scalar_lea.vmem %s1, %s171
      %p173 = scmp.lt.s32.totalorder %s17, 1
      %s174 = scalar_select %p173, %s17, 1
      %p175 = scmp.lt.s32.totalorder %s18, 0
      %s176 = scalar_select %p175, %s18, 0
      %s177 = smul.addr %s174, 8
      %s178 = sadd.s32 %s176, %s177
      %s179 = smul.addr %s178, 8
      %s180 = scalar_lea.vmem %s2, %s179
      %v182 = vld [vmem:[%s168] sm:$0xf]
      %v183 = vld [vmem:[%s168 + $0x10] sm:$0xf]
      %v184 = vld [vmem:[%s168 + $0x20] sm:$0xf]
      %v185 = vld [vmem:[%s168 + $0x30] sm:$0xf]
      %v186 = vld [vmem:[%s168 + $0x40] sm:$0xf]
      %v187 = vld [vmem:[%s168 + $0x50] sm:$0xf]
      %v188 = vld [vmem:[%s168 + $0x60] sm:$0xf]
      %v189 = vld [vmem:[%s168 + $0x70] sm:$0xf]
      %v198 = vunpack.c.l.b16 %v182
      %v199 = vunpack.c.l.b16 %v183
      %v200 = vunpack.c.l.b16 %v184
      %v201 = vunpack.c.l.b16 %v185
      %v202 = vunpack.c.l.b16 %v186
      %v203 = vunpack.c.l.b16 %v187
      %v204 = vunpack.c.l.b16 %v188
      %v205 = vunpack.c.l.b16 %v189
      %v206 = vpack.c.b16 %v199, %v198
      %v207 = vpack.c.b16 %v201, %v200
      %v208 = vpack.c.b16 %v203, %v202
      %v209 = vpack.c.b16 %v205, %v204
      %vm214 = vcmask 64512
      %215 = vst.msk [vmem:[#allocation2] sm:$0xff] %vm214, %v206
      %216 = vst.msk [vmem:[#allocation2 + $0x8] sm:$0xff] %vm214, %v207
      %217 = vst.msk [vmem:[#allocation2 + $0x10] sm:$0xff] %vm214, %v208
      %218 = vst.msk [vmem:[#allocation2 + $0x18] sm:$0xff] %vm214, %v209
      %v219 = vld [vmem:[%s168] sm:$0xf]
      %v220 = vld [vmem:[%s168 + $0x4] sm:$0x1]
      %v221 = vld [vmem:[%s168 + $0x10] sm:$0xf]
      %v222 = vld [vmem:[%s168 + $0x14] sm:$0x1]
      %v223 = vld [vmem:[%s168 + $0x20] sm:$0xf]
      %v224 = vld [vmem:[%s168 + $0x24] sm:$0x1]
      %v225 = vld [vmem:[%s168 + $0x30] sm:$0xf]
      %v226 = vld [vmem:[%s168 + $0x34] sm:$0x1]
      %v227 = vld [vmem:[%s168 + $0x40] sm:$0xf]
      %v228 = vld [vmem:[%s168 + $0x44] sm:$0x1]
      %v229 = vld [vmem:[%s168 + $0x50] sm:$0xf]
      %v230 = vld [vmem:[%s168 + $0x54] sm:$0x1]
      %v231 = vld [vmem:[%s168 + $0x60] sm:$0xf]
      %v232 = vld [vmem:[%s168 + $0x64] sm:$0x1]
      %v233 = vld [vmem:[%s168 + $0x70] sm:$0xf]
      %v234 = vld [vmem:[%s168 + $0x74] sm:$0x1]
      %vm235 = vsmask.f32 3328
      %vm236 = vsmask.f32 7440
      %vm237 = vmor %vm235, %vm236
      %v239 = vshrl.u32 %v219, 16
      %v241 = vrot.slane %v239, 4
      %v242 = vshll.u32 %v219, 16
      %v244 = vrot.slane %v242, 5
      %v245 = vor.u32 %v241, %v244
      %v246 = vrot.slane %v245, 4
      %v248 = vshll.u32 %v220, 16
      %v250 = vrot.slane %v248, 5
      %v251 = vsel %vm237, %v246, %v250
      %v253 = vshrl.u32 %v221, 16
      %v255 = vrot.slane %v253, 4
      %v256 = vshll.u32 %v221, 16
      %v258 = vrot.slane %v256, 5
      %v259 = vor.u32 %v255, %v258
      %v260 = vrot.slane %v259, 4
      %v262 = vshll.u32 %v222, 16
      %v264 = vrot.slane %v262, 5
      %v265 = vsel %vm237, %v260, %v264
      %v267 = vshrl.u32 %v223, 16
      %v269 = vrot.slane %v267, 4
      %v270 = vshll.u32 %v223, 16
      %v272 = vrot.slane %v270, 5
      %v273 = vor.u32 %v269, %v272
      %v274 = vrot.slane %v273, 4
      %v276 = vshll.u32 %v224, 16
      %v278 = vrot.slane %v276, 5
      %v279 = vsel %vm237, %v274, %v278
      %v281 = vshrl.u32 %v225, 16
      %v283 = vrot.slane %v281, 4
      %v284 = vshll.u32 %v225, 16
      %v286 = vrot.slane %v284, 5
      %v287 = vor.u32 %v283, %v286
      %v288 = vrot.slane %v287, 4
      %v290 = vshll.u32 %v226, 16
      %v292 = vrot.slane %v290, 5
      %v293 = vsel %vm237, %v288, %v292
      %v295 = vshrl.u32 %v227, 16
      %v297 = vrot.slane %v295, 4
      %v298 = vshll.u32 %v227, 16
      %v300 = vrot.slane %v298, 5
      %v301 = vor.u32 %v297, %v300
      %v302 = vrot.slane %v301, 4
      %v304 = vshll.u32 %v228, 16
      %v306 = vrot.slane %v304, 5
      %v307 = vsel %vm237, %v302, %v306
      %v309 = vshrl.u32 %v229, 16
      %v311 = vrot.slane %v309, 4
      %v312 = vshll.u32 %v229, 16
      %v314 = vrot.slane %v312, 5
      %v315 = vor.u32 %v311, %v314
      %v316 = vrot.slane %v315, 4
      %v318 = vshll.u32 %v230, 16
      %v320 = vrot.slane %v318, 5
      %v321 = vsel %vm237, %v316, %v320
      %v323 = vshrl.u32 %v231, 16
      %v325 = vrot.slane %v323, 4
      %v326 = vshll.u32 %v231, 16
      %v328 = vrot.slane %v326, 5
      %v329 = vor.u32 %v325, %v328
      %v330 = vrot.slane %v329, 4
      %v332 = vshll.u32 %v232, 16
      %v334 = vrot.slane %v332, 5
      %v335 = vsel %vm237, %v330, %v334
      %v337 = vshrl.u32 %v233, 16
      %v339 = vrot.slane %v337, 4
      %v340 = vshll.u32 %v233, 16
      %v342 = vrot.slane %v340, 5
      %v343 = vor.u32 %v339, %v342
      %v344 = vrot.slane %v343, 4
      %v346 = vshll.u32 %v234, 16
      %v348 = vrot.slane %v346, 5
      %v349 = vsel %vm237, %v344, %v348
      %v350 = vunpack.c.l.b16 %v251
      %v351 = vunpack.c.l.b16 %v265
      %v352 = vunpack.c.l.b16 %v279
      %v353 = vunpack.c.l.b16 %v293
      %v354 = vunpack.c.l.b16 %v307
      %v355 = vunpack.c.l.b16 %v321
      %v356 = vunpack.c.l.b16 %v335
      %v357 = vunpack.c.l.b16 %v349
      %v358 = vpack.c.b16 %v351, %v350
      %v359 = vpack.c.b16 %v353, %v352
      %v360 = vpack.c.b16 %v355, %v354
      %v361 = vpack.c.b16 %v357, %v356
      %362 = vrot.lane.b32.xlu0 %v358, 8
      %v363 = vpop.permute.xlu0 %362
      %364 = vrot.lane.b32.xlu0 %v359, 8
      %v365 = vpop.permute.xlu0 %364
      %366 = vrot.lane.b32.xlu0 %v360, 8
      %v367 = vpop.permute.xlu0 %366
      %368 = vrot.lane.b32.xlu0 %v361, 8
      %v369 = vpop.permute.xlu0 %368
      %vm374 = vcmask 130112
      %375 = vst.msk [vmem:[#allocation2] sm:$0xff] %vm374, %v363
      %376 = vst.msk [vmem:[#allocation2 + $0x8] sm:$0xff] %vm374, %v365
      %377 = vst.msk [vmem:[#allocation2 + $0x10] sm:$0xff] %vm374, %v367
      %378 = vst.msk [vmem:[#allocation2 + $0x18] sm:$0xff] %vm374, %v369
      %s379 = scalar_lea.vmem %s168, 8
      %v380 = vld [vmem:[%s379] sm:$0xf]
      %v381 = vld [vmem:[%s379 + $0x10] sm:$0xf]
      %v382 = vld [vmem:[%s379 + $0x20] sm:$0xf]
      %v383 = vld [vmem:[%s379 + $0x30] sm:$0xf]
      %v384 = vld [vmem:[%s379 + $0x40] sm:$0xf]
      %v385 = vld [vmem:[%s379 + $0x50] sm:$0xf]
      %v386 = vld [vmem:[%s379 + $0x60] sm:$0xf]
      %v387 = vld [vmem:[%s379 + $0x70] sm:$0xf]
      %v396 = vunpack.c.l.b16 %v380
      %v397 = vunpack.c.l.b16 %v381
      %v398 = vunpack.c.l.b16 %v382
      %v399 = vunpack.c.l.b16 %v383
      %v400 = vunpack.c.l.b16 %v384
      %v401 = vunpack.c.l.b16 %v385
      %v402 = vunpack.c.l.b16 %v386
      %v403 = vunpack.c.l.b16 %v387
      %v404 = vpack.c.b16 %v397, %v396
      %v405 = vpack.c.b16 %v399, %v398
      %v406 = vpack.c.b16 %v401, %v400
      %v407 = vpack.c.b16 %v403, %v402
      %408 = vrot.lane.b32.xlu0 %v404, 16
      %v409 = vpop.permute.xlu0 %408
      %410 = vrot.lane.b32.xlu0 %v405, 16
      %v411 = vpop.permute.xlu0 %410
      %412 = vrot.lane.b32.xlu0 %v406, 16
      %v413 = vpop.permute.xlu0 %412
      %414 = vrot.lane.b32.xlu0 %v407, 16
      %v415 = vpop.permute.xlu0 %414
      %vm420 = vcmask 195712
      %421 = vst.msk [vmem:[#allocation2] sm:$0xff] %vm420, %v409
      %422 = vst.msk [vmem:[#allocation2 + $0x8] sm:$0xff] %vm420, %v411
      %423 = vst.msk [vmem:[#allocation2 + $0x10] sm:$0xff] %vm420, %v413
      %424 = vst.msk [vmem:[#allocation2 + $0x18] sm:$0xff] %vm420, %v415
      %v425 = vld [vmem:[%s379] sm:$0xf]
      %v426 = vld [vmem:[%s379 + $0x4] sm:$0x1]
      %v427 = vld [vmem:[%s379 + $0x10] sm:$0xf]
      %v428 = vld [vmem:[%s379 + $0x14] sm:$0x1]
      %v429 = vld [vmem:[%s379 + $0x20] sm:$0xf]
      %v430 = vld [vmem:[%s379 + $0x24] sm:$0x1]
      %v431 = vld [vmem:[%s379 + $0x30] sm:$0xf]
      %v432 = vld [vmem:[%s379 + $0x34] sm:$0x1]
      %v433 = vld [vmem:[%s379 + $0x40] sm:$0xf]
      %v434 = vld [vmem:[%s379 + $0x44] sm:$0x1]
      %v435 = vld [vmem:[%s379 + $0x50] sm:$0xf]
      %v436 = vld [vmem:[%s379 + $0x54] sm:$0x1]
      %v437 = vld [vmem:[%s379 + $0x60] sm:$0xf]
      %v438 = vld [vmem:[%s379 + $0x64] sm:$0x1]
      %v439 = vld [vmem:[%s379 + $0x70] sm:$0xf]
      %v440 = vld [vmem:[%s379 + $0x74] sm:$0x1]
      %v442 = vshrl.u32 %v425, 16
      %v444 = vrot.slane %v442, 4
      %v445 = vshll.u32 %v425, 16
      %v447 = vrot.slane %v445, 5
      %v448 = vor.u32 %v444, %v447
      %v449 = vrot.slane %v448, 4
      %v451 = vshll.u32 %v426, 16
      %v453 = vrot.slane %v451, 5
      %v454 = vsel %vm237, %v449, %v453
      %v456 = vshrl.u32 %v427, 16
      %v458 = vrot.slane %v456, 4
      %v459 = vshll.u32 %v427, 16
      %v461 = vrot.slane %v459, 5
      %v462 = vor.u32 %v458, %v461
      %v463 = vrot.slane %v462, 4
      %v465 = vshll.u32 %v428, 16
      %v467 = vrot.slane %v465, 5
      %v468 = vsel %vm237, %v463, %v467
      %v470 = vshrl.u32 %v429, 16
      %v472 = vrot.slane %v470, 4
      %v473 = vshll.u32 %v429, 16
      %v475 = vrot.slane %v473, 5
      %v476 = vor.u32 %v472, %v475
      %v477 = vrot.slane %v476, 4
      %v479 = vshll.u32 %v430, 16
      %v481 = vrot.slane %v479, 5
      %v482 = vsel %vm237, %v477, %v481
      %v484 = vshrl.u32 %v431, 16
      %v486 = vrot.slane %v484, 4
      %v487 = vshll.u32 %v431, 16
      %v489 = vrot.slane %v487, 5
      %v490 = vor.u32 %v486, %v489
      %v491 = vrot.slane %v490, 4
      %v493 = vshll.u32 %v432, 16
      %v495 = vrot.slane %v493, 5
      %v496 = vsel %vm237, %v491, %v495
      %v498 = vshrl.u32 %v433, 16
      %v500 = vrot.slane %v498, 4
      %v501 = vshll.u32 %v433, 16
      %v503 = vrot.slane %v501, 5
      %v504 = vor.u32 %v500, %v503
      %v505 = vrot.slane %v504, 4
      %v507 = vshll.u32 %v434, 16
      %v509 = vrot.slane %v507, 5
      %v510 = vsel %vm237, %v505, %v509
      %v512 = vshrl.u32 %v435, 16
      %v514 = vrot.slane %v512, 4
      %v515 = vshll.u32 %v435, 16
      %v517 = vrot.slane %v515, 5
      %v518 = vor.u32 %v514, %v517
      %v519 = vrot.slane %v518, 4
      %v521 = vshll.u32 %v436, 16
      %v523 = vrot.slane %v521, 5
      %v524 = vsel %vm237, %v519, %v523
      %v526 = vshrl.u32 %v437, 16
      %v528 = vrot.slane %v526, 4
      %v529 = vshll.u32 %v437, 16
      %v531 = vrot.slane %v529, 5
      %v532 = vor.u32 %v528, %v531
      %v533 = vrot.slane %v532, 4
      %v535 = vshll.u32 %v438, 16
      %v537 = vrot.slane %v535, 5
      %v538 = vsel %vm237, %v533, %v537
      %v540 = vshrl.u32 %v439, 16
      %v542 = vrot.slane %v540, 4
      %v543 = vshll.u32 %v439, 16
      %v545 = vrot.slane %v543, 5
      %v546 = vor.u32 %v542, %v545
      %v547 = vrot.slane %v546, 4
      %v549 = vshll.u32 %v440, 16
      %v551 = vrot.slane %v549, 5
      %v552 = vsel %vm237, %v547, %v551
      %v553 = vunpack.c.l.b16 %v454
      %v554 = vunpack.c.l.b16 %v468
      %v555 = vunpack.c.l.b16 %v482
      %v556 = vunpack.c.l.b16 %v496
      %v557 = vunpack.c.l.b16 %v510
      %v558 = vunpack.c.l.b16 %v524
      %v559 = vunpack.c.l.b16 %v538
      %v560 = vunpack.c.l.b16 %v552
      %v561 = vpack.c.b16 %v554, %v553
      %v562 = vpack.c.b16 %v556, %v555
      %v563 = vpack.c.b16 %v558, %v557
      %v564 = vpack.c.b16 %v560, %v559
      %565 = vrot.lane.b32.xlu0 %v561, 24
      %v566 = vpop.permute.xlu0 %565
      %567 = vrot.lane.b32.xlu0 %v562, 24
      %v568 = vpop.permute.xlu0 %567
      %569 = vrot.lane.b32.xlu0 %v563, 24
      %v570 = vpop.permute.xlu0 %569
      %571 = vrot.lane.b32.xlu0 %v564, 24
      %v572 = vpop.permute.xlu0 %571
      %vm577 = vcmask 261312
      %578 = vst.msk [vmem:[#allocation2] sm:$0xff] %vm577, %v566
      %579 = vst.msk [vmem:[#allocation2 + $0x8] sm:$0xff] %vm577, %v568
      %580 = vst.msk [vmem:[#allocation2 + $0x10] sm:$0xff] %vm577, %v570
      %581 = vst.msk [vmem:[#allocation2 + $0x18] sm:$0xff] %vm577, %v572
      %s582 = scalar_lea.vmem %s168, 16
      %v583 = vld [vmem:[%s582] sm:$0xf]
      %v584 = vld [vmem:[%s582 + $0x10] sm:$0xf]
      %v585 = vld [vmem:[%s582 + $0x20] sm:$0xf]
      %v586 = vld [vmem:[%s582 + $0x30] sm:$0xf]
      %v587 = vld [vmem:[%s582 + $0x40] sm:$0xf]
      %v588 = vld [vmem:[%s582 + $0x50] sm:$0xf]
      %v589 = vld [vmem:[%s582 + $0x60] sm:$0xf]
      %v590 = vld [vmem:[%s582 + $0x70] sm:$0xf]
      %v599 = vunpack.c.l.b16 %v583
      %v600 = vunpack.c.l.b16 %v584
      %v601 = vunpack.c.l.b16 %v585
      %v602 = vunpack.c.l.b16 %v586
      %v603 = vunpack.c.l.b16 %v587
      %v604 = vunpack.c.l.b16 %v588
      %v605 = vunpack.c.l.b16 %v589
      %v606 = vunpack.c.l.b16 %v590
      %v607 = vpack.c.b16 %v600, %v599
      %v608 = vpack.c.b16 %v602, %v601
      %v609 = vpack.c.b16 %v604, %v603
      %v610 = vpack.c.b16 %v606, %v605
      %611 = vrot.lane.b32.xlu0 %v607, 32
      %v612 = vpop.permute.xlu0 %611
      %613 = vrot.lane.b32.xlu0 %v608, 32
      %v614 = vpop.permute.xlu0 %613
      %615 = vrot.lane.b32.xlu0 %v609, 32
      %v616 = vpop.permute.xlu0 %615
      %617 = vrot.lane.b32.xlu0 %v610, 32
      %v618 = vpop.permute.xlu0 %617
      %vm623 = vcmask 326912
      %624 = vst.msk [vmem:[#allocation2] sm:$0xff] %vm623, %v612
      %625 = vst.msk [vmem:[#allocation2 + $0x8] sm:$0xff] %vm623, %v614
      %626 = vst.msk [vmem:[#allocation2 + $0x10] sm:$0xff] %vm623, %v616
      %627 = vst.msk [vmem:[#allocation2 + $0x18] sm:$0xff] %vm623, %v618
      %v628 = vld [vmem:[%s582] sm:$0xf]
      %v629 = vld [vmem:[%s582 + $0x4] sm:$0x1]
      %v630 = vld [vmem:[%s582 + $0x10] sm:$0xf]
      %v631 = vld [vmem:[%s582 + $0x14] sm:$0x1]
      %v632 = vld [vmem:[%s582 + $0x20] sm:$0xf]
      %v633 = vld [vmem:[%s582 + $0x24] sm:$0x1]
      %v634 = vld [vmem:[%s582 + $0x30] sm:$0xf]
      %v635 = vld [vmem:[%s582 + $0x34] sm:$0x1]
      %v636 = vld [vmem:[%s582 + $0x40] sm:$0xf]
      %v637 = vld [vmem:[%s582 + $0x44] sm:$0x1]
      %v638 = vld [vmem:[%s582 + $0x50] sm:$0xf]
      %v639 = vld [vmem:[%s582 + $0x54] sm:$0x1]
      %v640 = vld [vmem:[%s582 + $0x60] sm:$0xf]
      %v641 = vld [vmem:[%s582 + $0x64] sm:$0x1]
      %v642 = vld [vmem:[%s582 + $0x70] sm:$0xf]
      %v643 = vld [vmem:[%s582 + $0x74] sm:$0x1]
      %v645 = vshrl.u32 %v628, 16
      %v647 = vrot.slane %v645, 4
      %v648 = vshll.u32 %v628, 16
      %v650 = vrot.slane %v648, 5
      %v651 = vor.u32 %v647, %v650
      %v652 = vrot.slane %v651, 4
      %v654 = vshll.u32 %v629, 16
      %v656 = vrot.slane %v654, 5
      %v657 = vsel %vm237, %v652, %v656
      %v659 = vshrl.u32 %v630, 16
      %v661 = vrot.slane %v659, 4
      %v662 = vshll.u32 %v630, 16
      %v664 = vrot.slane %v662, 5
      %v665 = vor.u32 %v661, %v664
      %v666 = vrot.slane %v665, 4
      %v668 = vshll.u32 %v631, 16
      %v670 = vrot.slane %v668, 5
      %v671 = vsel %vm237, %v666, %v670
      %v673 = vshrl.u32 %v632, 16
      %v675 = vrot.slane %v673, 4
      %v676 = vshll.u32 %v632, 16
      %v678 = vrot.slane %v676, 5
      %v679 = vor.u32 %v675, %v678
      %v680 = vrot.slane %v679, 4
      %v682 = vshll.u32 %v633, 16
      %v684 = vrot.slane %v682, 5
      %v685 = vsel %vm237, %v680, %v684
      %v687 = vshrl.u32 %v634, 16
      %v689 = vrot.slane %v687, 4
      %v690 = vshll.u32 %v634, 16
      %v692 = vrot.slane %v690, 5
      %v693 = vor.u32 %v689, %v692
      %v694 = vrot.slane %v693, 4
      %v696 = vshll.u32 %v635, 16
      %v698 = vrot.slane %v696, 5
      %v699 = vsel %vm237, %v694, %v698
      %v701 = vshrl.u32 %v636, 16
      %v703 = vrot.slane %v701, 4
      %v704 = vshll.u32 %v636, 16
      %v706 = vrot.slane %v704, 5
      %v707 = vor.u32 %v703, %v706
      %v708 = vrot.slane %v707, 4
      %v710 = vshll.u32 %v637, 16
      %v712 = vrot.slane %v710, 5
      %v713 = vsel %vm237, %v708, %v712
      %v715 = vshrl.u32 %v638, 16
      %v717 = vrot.slane %v715, 4
      %v718 = vshll.u32 %v638, 16
      %v720 = vrot.slane %v718, 5
      %v721 = vor.u32 %v717, %v720
      %v722 = vrot.slane %v721, 4
      %v724 = vshll.u32 %v639, 16
      %v726 = vrot.slane %v724, 5
      %v727 = vsel %vm237, %v722, %v726
      %v729 = vshrl.u32 %v640, 16
      %v731 = vrot.slane %v729, 4
      %v732 = vshll.u32 %v640, 16
      %v734 = vrot.slane %v732, 5
      %v735 = vor.u32 %v731, %v734
      %v736 = vrot.slane %v735, 4
      %v738 = vshll.u32 %v641, 16
      %v740 = vrot.slane %v738, 5
      %v741 = vsel %vm237, %v736, %v740
      %v743 = vshrl.u32 %v642, 16
      %v745 = vrot.slane %v743, 4
      %v746 = vshll.u32 %v642, 16
      %v748 = vrot.slane %v746, 5
      %v749 = vor.u32 %v745, %v748
      %v750 = vrot.slane %v749, 4
      %v752 = vshll.u32 %v643, 16
      %v754 = vrot.slane %v752, 5
      %v755 = vsel %vm237, %v750, %v754
      %v756 = vunpack.c.l.b16 %v657
      %v757 = vunpack.c.l.b16 %v671
      %v758 = vunpack.c.l.b16 %v685
      %v759 = vunpack.c.l.b16 %v699
      %v760 = vunpack.c.l.b16 %v713
      %v761 = vunpack.c.l.b16 %v727
      %v762 = vunpack.c.l.b16 %v741
      %v763 = vunpack.c.l.b16 %v755
      %v764 = vpack.c.b16 %v757, %v756
      %v765 = vpack.c.b16 %v759, %v758
      %v766 = vpack.c.b16 %v761, %v760
      %v767 = vpack.c.b16 %v763, %v762
      %768 = vrot.lane.b32.xlu0 %v764, 40
      %v769 = vpop.permute.xlu0 %768
      %770 = vrot.lane.b32.xlu0 %v765, 40
      %v771 = vpop.permute.xlu0 %770
      %772 = vrot.lane.b32.xlu0 %v766, 40
      %v773 = vpop.permute.xlu0 %772
      %774 = vrot.lane.b32.xlu0 %v767, 40
      %v775 = vpop.permute.xlu0 %774
      %vm780 = vcmask 392512
      %781 = vst.msk [vmem:[#allocation2] sm:$0xff] %vm780, %v769
      %782 = vst.msk [vmem:[#allocation2 + $0x8] sm:$0xff] %vm780, %v771
      %783 = vst.msk [vmem:[#allocation2 + $0x10] sm:$0xff] %vm780, %v773
      %784 = vst.msk [vmem:[#allocation2 + $0x18] sm:$0xff] %vm780, %v775
      %s785 = scalar_lea.vmem %s168, 24
      %v786 = vld [vmem:[%s785] sm:$0xf]
      %v787 = vld [vmem:[%s785 + $0x10] sm:$0xf]
      %v788 = vld [vmem:[%s785 + $0x20] sm:$0xf]
      %v789 = vld [vmem:[%s785 + $0x30] sm:$0xf]
      %v790 = vld [vmem:[%s785 + $0x40] sm:$0xf]
      %v791 = vld [vmem:[%s785 + $0x50] sm:$0xf]
      %v792 = vld [vmem:[%s785 + $0x60] sm:$0xf]
      %v793 = vld [vmem:[%s785 + $0x70] sm:$0xf]
      %v802 = vunpack.c.l.b16 %v786
      %v803 = vunpack.c.l.b16 %v787
      %v804 = vunpack.c.l.b16 %v788
      %v805 = vunpack.c.l.b16 %v789
      %v806 = vunpack.c.l.b16 %v790
      %v807 = vunpack.c.l.b16 %v791
      %v808 = vunpack.c.l.b16 %v792
      %v809 = vunpack.c.l.b16 %v793
      %v810 = vpack.c.b16 %v803, %v802
      %v811 = vpack.c.b16 %v805, %v804
      %v812 = vpack.c.b16 %v807, %v806
      %v813 = vpack.c.b16 %v809, %v808
      %814 = vrot.lane.b32.xlu0 %v810, 48
      %v815 = vpop.permute.xlu0 %814
      %816 = vrot.lane.b32.xlu0 %v811, 48
      %v817 = vpop.permute.xlu0 %816
      %818 = vrot.lane.b32.xlu0 %v812, 48
      %v819 = vpop.permute.xlu0 %818
      %820 = vrot.lane.b32.xlu0 %v813, 48
      %v821 = vpop.permute.xlu0 %820
      %vm826 = vcmask 458112
      %827 = vst.msk [vmem:[#allocation2] sm:$0xff] %vm826, %v815
      %828 = vst.msk [vmem:[#allocation2 + $0x8] sm:$0xff] %vm826, %v817
      %829 = vst.msk [vmem:[#allocation2 + $0x10] sm:$0xff] %vm826, %v819
      %830 = vst.msk [vmem:[#allocation2 + $0x18] sm:$0xff] %vm826, %v821
      %v831 = vld [vmem:[%s785] sm:$0xf]
      %v832 = vld [vmem:[%s785 + $0x4] sm:$0x1]
      %v833 = vld [vmem:[%s785 + $0x10] sm:$0xf]
      %v834 = vld [vmem:[%s785 + $0x14] sm:$0x1]
      %v835 = vld [vmem:[%s785 + $0x20] sm:$0xf]
      %v836 = vld [vmem:[%s785 + $0x24] sm:$0x1]
      %v837 = vld [vmem:[%s785 + $0x30] sm:$0xf]
      %v838 = vld [vmem:[%s785 + $0x34] sm:$0x1]
      %v839 = vld [vmem:[%s785 + $0x40] sm:$0xf]
      %v840 = vld [vmem:[%s785 + $0x44] sm:$0x1]
      %v841 = vld [vmem:[%s785 + $0x50] sm:$0xf]
      %v842 = vld [vmem:[%s785 + $0x54] sm:$0x1]
      %v843 = vld [vmem:[%s785 + $0x60] sm:$0xf]
      %v844 = vld [vmem:[%s785 + $0x64] sm:$0x1]
      %v845 = vld [vmem:[%s785 + $0x70] sm:$0xf]
      %v846 = vld [vmem:[%s785 + $0x74] sm:$0x1]
      %v848 = vshrl.u32 %v831, 16
      %v850 = vrot.slane %v848, 4
      %v851 = vshll.u32 %v831, 16
      %v853 = vrot.slane %v851, 5
      %v854 = vor.u32 %v850, %v853
      %v855 = vrot.slane %v854, 4
      %v857 = vshll.u32 %v832, 16
      %v859 = vrot.slane %v857, 5
      %v860 = vsel %vm237, %v855, %v859
      %v862 = vshrl.u32 %v833, 16
      %v864 = vrot.slane %v862, 4
      %v865 = vshll.u32 %v833, 16
      %v867 = vrot.slane %v865, 5
      %v868 = vor.u32 %v864, %v867
      %v869 = vrot.slane %v868, 4
      %v871 = vshll.u32 %v834, 16
      %v873 = vrot.slane %v871, 5
      %v874 = vsel %vm237, %v869, %v873
      %v876 = vshrl.u32 %v835, 16
      %v878 = vrot.slane %v876, 4
      %v879 = vshll.u32 %v835, 16
      %v881 = vrot.slane %v879, 5
      %v882 = vor.u32 %v878, %v881
      %v883 = vrot.slane %v882, 4
      %v885 = vshll.u32 %v836, 16
      %v887 = vrot.slane %v885, 5
      %v888 = vsel %vm237, %v883, %v887
      %v890 = vshrl.u32 %v837, 16
      %v892 = vrot.slane %v890, 4
      %v893 = vshll.u32 %v837, 16
      %v895 = vrot.slane %v893, 5
      %v896 = vor.u32 %v892, %v895
      %v897 = vrot.slane %v896, 4
      %v899 = vshll.u32 %v838, 16
      %v901 = vrot.slane %v899, 5
      %v902 = vsel %vm237, %v897, %v901
      %v904 = vshrl.u32 %v839, 16
      %v906 = vrot.slane %v904, 4
      %v907 = vshll.u32 %v839, 16
      %v909 = vrot.slane %v907, 5
      %v910 = vor.u32 %v906, %v909
      %v911 = vrot.slane %v910, 4
      %v913 = vshll.u32 %v840, 16
      %v915 = vrot.slane %v913, 5
      %v916 = vsel %vm237, %v911, %v915
      %v918 = vshrl.u32 %v841, 16
      %v920 = vrot.slane %v918, 4
      %v921 = vshll.u32 %v841, 16
      %v923 = vrot.slane %v921, 5
      %v924 = vor.u32 %v920, %v923
      %v925 = vrot.slane %v924, 4
      %v927 = vshll.u32 %v842, 16
      %v929 = vrot.slane %v927, 5
      %v930 = vsel %vm237, %v925, %v929
      %v932 = vshrl.u32 %v843, 16
      %v934 = vrot.slane %v932, 4
      %v935 = vshll.u32 %v843, 16
      %v937 = vrot.slane %v935, 5
      %v938 = vor.u32 %v934, %v937
      %v939 = vrot.slane %v938, 4
      %v941 = vshll.u32 %v844, 16
      %v943 = vrot.slane %v941, 5
      %v944 = vsel %vm237, %v939, %v943
      %v946 = vshrl.u32 %v845, 16
      %v948 = vrot.slane %v946, 4
      %v949 = vshll.u32 %v845, 16
      %v951 = vrot.slane %v949, 5
      %v952 = vor.u32 %v948, %v951
      %v953 = vrot.slane %v952, 4
      %v955 = vshll.u32 %v846, 16
      %v957 = vrot.slane %v955, 5
      %v958 = vsel %vm237, %v953, %v957
      %v959 = vunpack.c.l.b16 %v860
      %v960 = vunpack.c.l.b16 %v874
      %v961 = vunpack.c.l.b16 %v888
      %v962 = vunpack.c.l.b16 %v902
      %v963 = vunpack.c.l.b16 %v916
      %v964 = vunpack.c.l.b16 %v930
      %v965 = vunpack.c.l.b16 %v944
      %v966 = vunpack.c.l.b16 %v958
      %v967 = vpack.c.b16 %v960, %v959
      %v968 = vpack.c.b16 %v962, %v961
      %v969 = vpack.c.b16 %v964, %v963
      %v970 = vpack.c.b16 %v966, %v965
      %971 = vrot.lane.b32.xlu0 %v967, 56
      %v972 = vpop.permute.xlu0 %971
      %973 = vrot.lane.b32.xlu0 %v968, 56
      %v974 = vpop.permute.xlu0 %973
      %975 = vrot.lane.b32.xlu0 %v969, 56
      %v976 = vpop.permute.xlu0 %975
      %977 = vrot.lane.b32.xlu0 %v970, 56
      %v978 = vpop.permute.xlu0 %977
      %vm983 = vcmask 523712
      %984 = vst.msk [vmem:[#allocation2] sm:$0xff] %vm983, %v972
      %985 = vst.msk [vmem:[#allocation2 + $0x8] sm:$0xff] %vm983, %v974
      %986 = vst.msk [vmem:[#allocation2 + $0x10] sm:$0xff] %vm983, %v976
      %987 = vst.msk [vmem:[#allocation2 + $0x18] sm:$0xff] %vm983, %v978
      %v988 = vld [vmem:[#allocation2] sm:$0xff]
      %v989 = vld [vmem:[#allocation2 + $0x8] sm:$0xff]
      %v990 = vld [vmem:[#allocation2 + $0x10] sm:$0xff]
      %v991 = vld [vmem:[#allocation2 + $0x18] sm:$0xff]
      %v992 = vld [vmem:[%s172] sm:$0xf]
      %v993 = vld [vmem:[%s172 + $0x4] sm:$0xf]
      %v994 = vld [vmem:[%s172 + $0x8] sm:$0xf]
      %v995 = vld [vmem:[%s172 + $0xc] sm:$0xf]
      %v996 = vld [vmem:[%s172 + $0x10] sm:$0xf]
      %v997 = vld [vmem:[%s172 + $0x14] sm:$0xf]
      %v998 = vld [vmem:[%s172 + $0x18] sm:$0xf]
      %v999 = vld [vmem:[%s172 + $0x1c] sm:$0xf]
      %v1008 = vunpack.c.l.b16 %v992
      %v1009 = vunpack.c.l.b16 %v993
      %v1010 = vunpack.c.l.b16 %v994
      %v1011 = vunpack.c.l.b16 %v995
      %v1012 = vunpack.c.l.b16 %v996
      %v1013 = vunpack.c.l.b16 %v997
      %v1014 = vunpack.c.l.b16 %v998
      %v1015 = vunpack.c.l.b16 %v999
      %v1016 = vpack.c.b16 %v1009, %v1008
      %v1017 = vpack.c.b16 %v1011, %v1010
      %v1018 = vpack.c.b16 %v1013, %v1012
      %v1019 = vpack.c.b16 %v1015, %v1014
      %vm1024 = vcmask 523264
      %v1026 = vsel %vm1024, %v988, 0
      %v1029 = vsel %vm1024, %v989, 0
      %v1032 = vsel %vm1024, %v990, 0
      %v1035 = vsel %vm1024, %v991, 0
      %1037 = vmatprep.subr.bf16.mxu0 0
      %1038 = vmatpush1.bf16.msra.mxu0 %v1016
      %1039 = vmatprep.subr.bf16.mxu0 0
      %1040 = vmatpush1.bf16.msra.mxu0 %v1017
      %1041 = vmatprep.subr.bf16.mxu0 0
      %1042 = vmatpush1.bf16.msra.mxu0 %v1018
      %1043 = vmatprep.subr.bf16.mxu0 0
      %1044 = vmatpush1.bf16.msra.mxu0 %v1019
      %1045 = vmatprep.subr.bf16.mxu0 0
      %1046 = vmatpush1.bf16.msra.mxu0 0
      %1047 = vmatprep.subr.bf16.mxu0 0
      %1048 = vmatpush1.bf16.msra.mxu0 0
      %1049 = vmatprep.subr.bf16.mxu0 0
      %1050 = vmatpush1.bf16.msra.mxu0 0
      %1051 = vmatprep.subr.bf16.mxu0 0
      %1052 = vmatpush1.bf16.msra.mxu0 0
      %1053 = vmatprep.subr.bf16.mxu0 0
      %1054 = vmatpush1.bf16.msra.mxu0 0
      %1055 = vmatprep.subr.bf16.mxu0 0
      %1056 = vmatpush1.bf16.msra.mxu0 0
      %1057 = vmatprep.subr.bf16.mxu0 0
      %1058 = vmatpush1.bf16.msra.mxu0 0
      %1059 = vmatprep.subr.bf16.mxu0 0
      %1060 = vmatpush1.bf16.msra.mxu0 0
      %1061 = vmatprep.subr.bf16.mxu0 0
      %1062 = vmatpush1.bf16.msra.mxu0 0
      %1063 = vmatprep.subr.bf16.mxu0 0
      %1064 = vmatpush1.bf16.msra.mxu0 0
      %1065 = vmatprep.subr.bf16.mxu0 0
      %1066 = vmatpush1.bf16.msra.mxu0 0
      %1067 = vmatprep.subr.bf16.mxu0 0
      %1068 = vmatpush1.bf16.msra.mxu0 0
      %1069 = vmatprep.mubr.bf16.mxu0 0
      %1070 = vmatmul.mubr.bf16.gmra.mrb[0].mxu0 %v1026
      %v1071 = vpop.f32.mrb[0].mxu0
      %v1072 = vadd.f32 0.0, %v1071
      %v1073 = vpop.f32.mrb[0].mxu0
      %v1074 = vpop.f32.mrb[0].mxu0
      %v1075 = vadd.f32 0.0, %v1074
      %v1076 = vpop.f32.mrb[0].mxu0
      %1077 = vmatprep.mubr.bf16.mxu0 0
      %1078 = vmatmul.mubr.bf16.gmra.mrb[0].mxu0 %v1029
      %v1079 = vpop.f32.mrb[0].mxu0
      %v1080 = vadd.f32 0.0, %v1079
      %v1081 = vpop.f32.mrb[0].mxu0
      %v1082 = vpop.f32.mrb[0].mxu0
      %v1083 = vadd.f32 0.0, %v1082
      %v1084 = vpop.f32.mrb[0].mxu0
      %1085 = vmatprep.mubr.bf16.mxu0 0
      %1086 = vmatmul.mubr.bf16.gmra.mrb[0].mxu0 %v1032
      %v1087 = vpop.f32.mrb[0].mxu0
      %v1088 = vadd.f32 0.0, %v1087
      %v1089 = vpop.f32.mrb[0].mxu0
      %v1090 = vpop.f32.mrb[0].mxu0
      %v1091 = vadd.f32 0.0, %v1090
      %v1092 = vpop.f32.mrb[0].mxu0
      %1093 = vmatprep.mubr.bf16.mxu0 0
      %1094 = vmatmul.mubr.bf16.gmra.mrb[0].mxu0 %v1035
      %v1095 = vpop.f32.mrb[0].mxu0
      %v1096 = vadd.f32 0.0, %v1095
      %v1097 = vpop.f32.mrb[0].mxu0
      %v1098 = vpop.f32.mrb[0].mxu0
      %v1099 = vadd.f32 0.0, %v1098
      %v1100 = vpop.f32.mrb[0].mxu0
      %1101 = vdwg.mxu0
      %v1102 = vadd.f32 %v1072, %v1075
      %v1103 = vadd.f32 %v1102, %v1080
      %v1104 = vadd.f32 %v1103, %v1083
      %v1105 = vadd.f32 %v1104, %v1088
      %v1106 = vadd.f32 %v1105, %v1091
      %v1107 = vadd.f32 %v1106, %v1096
      %v1108 = vadd.f32 %v1107, %v1099
      %v1109 = vrot.slane %v1108, 4
      %v1110 = vadd.f32 %v1108, %v1109
      %v1111 = vrot.slane %v1110, 2
      %v1112 = vadd.f32 %v1110, %v1111
      %v1113 = vrot.slane %v1112, 1
      %v1114 = vadd.f32 %v1112, %v1113
      %v1115 = vadd.f32 %v1114, 0.0
      %v1116 = vmul.f32 %v1072, %v1072
      %v1117 = vmul.f32 %v1075, %v1075
      %v1118 = vmul.f32 %v1080, %v1080
      %v1119 = vmul.f32 %v1083, %v1083
      %v1120 = vmul.f32 %v1088, %v1088
      %v1121 = vmul.f32 %v1091, %v1091
      %v1122 = vmul.f32 %v1096, %v1096
      %v1123 = vmul.f32 %v1099, %v1099
      %v1124 = vadd.f32 %v1116, %v1117
      %v1125 = vadd.f32 %v1124, %v1118
      %v1126 = vadd.f32 %v1125, %v1119
      %v1127 = vadd.f32 %v1126, %v1120
      %v1128 = vadd.f32 %v1127, %v1121
      %v1129 = vadd.f32 %v1128, %v1122
      %v1130 = vadd.f32 %v1129, %v1123
      %v1131 = vrot.slane %v1130, 4
      %v1132 = vadd.f32 %v1130, %v1131
      %v1133 = vrot.slane %v1132, 2
      %v1134 = vadd.f32 %v1132, %v1133
      %v1135 = vrot.slane %v1134, 1
      %v1136 = vadd.f32 %v1134, %v1135
      %v1137 = vadd.f32 %v1136, 0.0
      %1138 = vst [vmem:[%s180] sm:$0xff] %v1072
      %1139 = vst [vmem:[%s180 + $0x8] sm:$0xff] %v1075
      %1140 = vst [vmem:[%s180 + $0x10] sm:$0xff] %v1080
      %1141 = vst [vmem:[%s180 + $0x18] sm:$0xff] %v1083
      %1142 = vst [vmem:[%s180 + $0x20] sm:$0xff] %v1088
      %1143 = vst [vmem:[%s180 + $0x28] sm:$0xff] %v1091
      %1144 = vst [vmem:[%s180 + $0x30] sm:$0xff] %v1096
      %1145 = vst [vmem:[%s180 + $0x38] sm:$0xff] %v1099
      %v1146 = vmul.f32 %v1115, 0.015625
      %v1147 = vmul.f32 %v1137, 0.015625
      %v1148 = vmul.f32 %v1146, %v1146
      %v1149 = vsub.f32 %v1147, %v1148
      %v1150 = vmax.f32 %v1149, 0.0
      %v1151 = vadd.f32 %v1150, 1e-05
      %v1152 = vrsqrt.pop %v1151
      %v1153 = vld [vmem:[%s180] sm:$0xff]
      %v1154 = vld [vmem:[%s180 + $0x8] sm:$0xff]
      %v1155 = vld [vmem:[%s180 + $0x10] sm:$0xff]
      %v1156 = vld [vmem:[%s180 + $0x18] sm:$0xff]
      %v1157 = vld [vmem:[%s180 + $0x20] sm:$0xff]
      %v1158 = vld [vmem:[%s180 + $0x28] sm:$0xff]
      %v1159 = vld [vmem:[%s180 + $0x30] sm:$0xff]
      %v1160 = vld [vmem:[%s180 + $0x38] sm:$0xff]
      %v1161 = vsub.f32 %v1153, %v1146
      %v1162 = vsub.f32 %v1154, %v1146
      %v1163 = vsub.f32 %v1155, %v1146
      %v1164 = vsub.f32 %v1156, %v1146
      %v1165 = vsub.f32 %v1157, %v1146
      %v1166 = vsub.f32 %v1158, %v1146
      %v1167 = vsub.f32 %v1159, %v1146
      %v1168 = vsub.f32 %v1160, %v1146
      %v1169 = vmul.f32 %v1161, %v1152
      %v1170 = vmul.f32 %v1162, %v1152
      %v1171 = vmul.f32 %v1163, %v1152
      %v1172 = vmul.f32 %v1164, %v1152
      %v1173 = vmul.f32 %v1165, %v1152
      %v1174 = vmul.f32 %v1166, %v1152
      %v1175 = vmul.f32 %v1167, %v1152
      %v1176 = vmul.f32 %v1168, %v1152
      %vm1177 = vcmp.ge.f32.partialorder %v1169, 0.0
      %vm1178 = vcmp.ge.f32.partialorder %v1170, 0.0
      %vm1179 = vcmp.ge.f32.partialorder %v1171, 0.0
      %vm1180 = vcmp.ge.f32.partialorder %v1172, 0.0
      %vm1181 = vcmp.ge.f32.partialorder %v1173, 0.0
      %vm1182 = vcmp.ge.f32.partialorder %v1174, 0.0
      %vm1183 = vcmp.ge.f32.partialorder %v1175, 0.0
      %vm1184 = vcmp.ge.f32.partialorder %v1176, 0.0
      %v1185 = vmul.f32 %v1169, 0.2
      %v1186 = vmul.f32 %v1170, 0.2
      %v1187 = vmul.f32 %v1171, 0.2
      %v1188 = vmul.f32 %v1172, 0.2
      %v1189 = vmul.f32 %v1173, 0.2
      %v1190 = vmul.f32 %v1174, 0.2
      %v1191 = vmul.f32 %v1175, 0.2
      %v1192 = vmul.f32 %v1176, 0.2
      %v1193 = vsel %vm1177, %v1169, %v1185
      %v1194 = vsel %vm1178, %v1170, %v1186
      %v1195 = vsel %vm1179, %v1171, %v1187
      %v1196 = vsel %vm1180, %v1172, %v1188
      %v1197 = vsel %vm1181, %v1173, %v1189
      %v1198 = vsel %vm1182, %v1174, %v1190
      %v1199 = vsel %vm1183, %v1175, %v1191
      %v1200 = vsel %vm1184, %v1176, %v1192
      %1201 = vst [vmem:[%s180] sm:$0xff] %v1193
      %1202 = vst [vmem:[%s180 + $0x8] sm:$0xff] %v1194
      %1203 = vst [vmem:[%s180 + $0x10] sm:$0xff] %v1195
      %1204 = vst [vmem:[%s180 + $0x18] sm:$0xff] %v1196
      %1205 = vst [vmem:[%s180 + $0x20] sm:$0xff] %v1197
      %1206 = vst [vmem:[%s180 + $0x28] sm:$0xff] %v1198
      %1207 = vst [vmem:[%s180 + $0x30] sm:$0xff] %v1199
      %1208 = vst [vmem:[%s180 + $0x38] sm:$0xff] %v1200
      %p1209 = scmp.lt.s32.totalorder %s17, 1
      %s1210 = scalar_select %p1209, %s17, 1
      %p1211 = scmp.lt.s32.totalorder %s18, 0
      %s1212 = scalar_select %p1211, %s18, 0
      %s1213 = smul.addr %s1210, 8
      %s1214 = sadd.s32 %s1212, %s1213
      %s1215 = smul.addr %s1214, 8
      %s1216 = scalar_lea.vmem %s2, %s1215
      // Predicated region
      $region29: #{block_forward.1} parent=27 // pred_check
        %p1217 = pneg %p97
      $region30: #{block_forward.1} parent=27 // pred_check_branch
        %1219 = sbr.rel (%p1217) target = $region32
      $region31: #{block_forward.1} parent=27 // pred_region
        _
      $region32: #{block_forward.1} parent=27 // pred_fallthru
        _
    $region28: #{block_forward.1} parent=5 // pred_fallthru
      _
    %p1220 = scmp.le.s32.totalorder 2, %s8
    // Predicated region
    $region33: #{block_forward.1} parent=5 // pred_check
      %p1221 = pneg %p1220
    $region34: #{block_forward.1} parent=5 // pred_check_branch
      %1223 = sbr.rel (%p1221) target = $region36
    $region35: #{block_forward.1} parent=5 // pred_region
      %s1224 = ssub.s32 %s8, 2
      // Predicated region
      $region37: #{block_forward.1} parent=35 // pred_check
        %p1225 = pneg %p103
      $region38: #{block_forward.1} parent=35 // pred_check_branch
        %1227 = sbr.rel (%p1225) target = $region40
      $region39: #{block_forward.1} parent=35 // pred_region
        %p1228 = scmp.lt.s32.totalorder %s19, 1
        %s1229 = scalar_select %p1228, %s19, 1
        %p1230 = scmp.lt.s32.totalorder %s20, 0
        %s1231 = scalar_select %p1230, %s20, 0
        %s1232 = smul.addr %s1229, 8
        %s1233 = sadd.s32 %s1231, %s1232
        %s1234 = smul.addr %s1233, 8
        %s1235 = scalar_lea.vmem %s2, %s1234
      $region40: #{block_forward.1} parent=35 // pred_fallthru
        _
    $region36: #{block_forward.1} parent=5 // pred_fallthru
      _
  $region6: #{block_forward.1} parent=0 // loop_footer
    %s12 = sadd.s32 1, %s8
  $region7: #{block_forward.1} parent=0 // loop_footer_branch
    %7 = sbr.rel target = $region3
  $region8: #{block_forward.1} parent=0 // loop_exit
    _

</llo_original>
